<compile_context>
chip_gen: v5e
topology: v5e:2x2
jax: 0.10.0
libtpu: 0.0.40
codegen_flags: <defaults>
</compile_context>

<pallas_src>
import functools

import jax
import jax.numpy as jnp
from jax.experimental import pallas as pl
from jax.experimental.pallas import tpu as pltpu

BN_EPS = 1e-5
LANE = 128  # pad all feature axes to multiples of the 128-lane vreg width


def _pad_up(n: int, m: int) -> int:
    return ((n + m - 1) // m) * m


def _vmem_budget_bytes() -> int:
    """~80% of the per-TensorCore VMEM capacity (generation-aware)."""
    cap = None
    try:
        info = pltpu.get_tpu_info()
        cap = int(getattr(info, "vmem_capacity_bytes", 0)) or None
    except Exception:
        cap = None
    if cap is None:
        cap = 64 * 1024 * 1024  # conservative fallback: v7x per-TC VMEM
    return int(cap * 0.8)


def _row_mask(rows: int, row_start, n_real: int):
    r = jax.lax.broadcasted_iota(jnp.int32, (rows, 1), 0) + row_start
    return (r < n_real).astype(jnp.float32)


# --------------------------------------------------------------------------
# Path 1: monolithic fused kernel (everything VMEM-resident).
# --------------------------------------------------------------------------
def _make_fused_kernel(num_hidden: int, inv_n: float, n_pad: int, n_real: int):
    need_mask = n_pad != n_real

    def kernel(*refs):
        # refs = (x, [w, gamma, beta] * num_hidden, w_last, b_last, out)
        x_ref, out_ref = refs[0], refs[-1]
        p = refs[1:-1]

        # Read x once, cast straight to bf16 for the MXU.
        h = x_ref[...].astype(jnp.bfloat16)
        rmask = _row_mask(n_pad, 0, n_real) if need_mask else None

        idx = 0
        for _ in range(num_hidden):
            w_ref, g_ref, beta_ref = p[idx], p[idx + 1], p[idx + 2]
            idx += 3
            # Hidden Linear WITHOUT bias (cancelled by BN mean subtraction).
            z = jnp.dot(h, w_ref[...], preferred_element_type=jnp.float32)
            # BatchNorm1d training-mode batch stats (biased variance), f32.
            # TODO(synk): fold the two column reductions into one accumulation
            # pass (partial sum/sum_sq per batch tile) as in the tiled path.
            mean = jnp.sum(z, axis=0, keepdims=True) * inv_n
            mean_sq = jnp.sum(z * z, axis=0, keepdims=True) * inv_n
            var = jnp.maximum(mean_sq - mean * mean, 0.0)
            scale = g_ref[...] * jax.lax.rsqrt(var + BN_EPS)
            shift = beta_ref[...] - mean * scale
            # Fused BN + ReLU (+ optional row mask) + bf16 downcast: one pass.
            a = jnp.maximum(z * scale + shift, 0.0)
            if need_mask:
                a = a * rmask
            h = a.astype(jnp.bfloat16)

        w_ref, b_ref = p[idx], p[idx + 1]
        out_ref[...] = (
            jnp.dot(h, w_ref[...], preferred_element_type=jnp.float32) + b_ref[...]
        ).astype(out_ref.dtype)

    return kernel


# --------------------------------------------------------------------------
# Path 2: batch-tiled per-layer kernels (scales beyond VMEM; megacore friendly).
# --------------------------------------------------------------------------
def _stats_block(z):
    """Per-tile column sum / sum-of-squares, padded to an (8, H) dense block."""
    cs = jnp.sum(z, axis=0, keepdims=True)
    css = jnp.sum(z * z, axis=0, keepdims=True)
    pad = jnp.zeros((7, z.shape[1]), jnp.float32)
    return (jnp.concatenate([cs, pad], axis=0),
            jnp.concatenate([css, pad], axis=0))


def _first_layer_kernel(x_ref, w_ref, z_ref, ps_ref, pss_ref):
    z = jnp.dot(x_ref[...].astype(jnp.bfloat16), w_ref[...],
                preferred_element_type=jnp.float32)
    z_ref[...] = z
    ps_ref[...], pss_ref[...] = _stats_block(z)


def _make_mid_layer_kernel(tb: int, n_real: int, need_mask: bool):
    def kernel(scale_ref, shift_ref, z_ref, w_ref, zo_ref, ps_ref, pss_ref):
        # Apply previous layer's folded BN + ReLU, fused with this matmul.
        a = jnp.maximum(z_ref[...] * scale_ref[...] + shift_ref[...], 0.0)
        if need_mask:
            a = a * _row_mask(tb, pl.program_id(0) * tb, n_real)
        z2 = jnp.dot(a.astype(jnp.bfloat16), w_ref[...],
                     preferred_element_type=jnp.float32)
        zo_ref[...] = z2
        ps_ref[...], pss_ref[...] = _stats_block(z2)

    return kernel


def _last_layer_kernel(scale_ref, shift_ref, z_ref, w_ref, b_ref, o_ref):
    a = jnp.maximum(z_ref[...] * scale_ref[...] + shift_ref[...], 0.0)
    o_ref[...] = (
        jnp.dot(a.astype(jnp.bfloat16), w_ref[...],
                preferred_element_type=jnp.float32) + b_ref[...]
    ).astype(o_ref.dtype)


def _bn_scale_shift(ps, pss, gamma, beta, inv_n):
    s = ps.sum(axis=0, keepdims=True) * inv_n
    ss = pss.sum(axis=0, keepdims=True) * inv_n
    var = jnp.maximum(ss - s * s, 0.0)
    scale = gamma * jax.lax.rsqrt(var + BN_EPS)
    shift = beta - s * scale
    return scale, shift


def _forward_tiled(x, kparams, num_hidden, n_real, out_pad, tb, budget):
    n_pad, f_pad = x.shape
    n_tiles = n_pad // tb
    need_mask = n_pad != n_real
    inv_n = 1.0 / n_real
    cparams = pltpu.CompilerParams(dimension_semantics=("parallel",),
                                   vmem_limit_bytes=budget)

    def stat_out(h):
        return (jax.ShapeDtypeStruct((n_tiles * 8, h), jnp.float32),
                pl.BlockSpec((8, h), lambda i: (i, 0)))

    # First hidden layer: matmul + per-tile stats.
    w, g, beta = kparams[0], kparams[1], kparams[2]
    idx = 3
    hid = w.shape[1]
    ps_shape, ps_spec = stat_out(hid)
    z, ps, pss = pl.pallas_call(
        _first_layer_kernel,
        grid=(n_tiles,),
        out_shape=(jax.ShapeDtypeStruct((n_pad, hid), jnp.float32),
                   ps_shape, ps_shape),
        in_specs=[pl.BlockSpec((tb, f_pad), lambda i: (i, 0)),
                  pl.BlockSpec((f_pad, hid), lambda i: (0, 0))],
        out_specs=(pl.BlockSpec((tb, hid), lambda i: (i, 0)), ps_spec, ps_spec),
        compiler_params=cparams,
    )(x, w)
    scale, shift = _bn_scale_shift(ps, pss, g, beta, inv_n)

    # Middle hidden layers: BN+ReLU apply fused with the next matmul + stats.
    for _ in range(num_hidden - 1):
        w, g, beta = kparams[idx], kparams[idx + 1], kparams[idx + 2]
        idx += 3
        din, hid = w.shape
        ps_shape, ps_spec = stat_out(hid)
        z, ps, pss = pl.pallas_call(
            _make_mid_layer_kernel(tb, n_real, need_mask),
            grid=(n_tiles,),
            out_shape=(jax.ShapeDtypeStruct((n_pad, hid), jnp.float32),
                       ps_shape, ps_shape),
            in_specs=[pl.BlockSpec((1, din), lambda i: (0, 0)),
                      pl.BlockSpec((1, din), lambda i: (0, 0)),
                      pl.BlockSpec((tb, din), lambda i: (i, 0)),
                      pl.BlockSpec((din, hid), lambda i: (0, 0))],
            out_specs=(pl.BlockSpec((tb, hid), lambda i: (i, 0)),
                       ps_spec, ps_spec),
            compiler_params=cparams,
        )(scale, shift, z, w)
        scale, shift = _bn_scale_shift(ps, pss, g, beta, inv_n)

    # Final Linear (with bias), fused with the last BN+ReLU apply.
    w_last, b_last = kparams[idx], kparams[idx + 1]
    din = w_last.shape[0]
    out = pl.pallas_call(
        _last_layer_kernel,
        grid=(n_tiles,),
        out_shape=jax.ShapeDtypeStruct((n_pad, out_pad), jnp.float32),
        in_specs=[pl.BlockSpec((1, din), lambda i: (0, 0)),
                  pl.BlockSpec((1, din), lambda i: (0, 0)),
                  pl.BlockSpec((tb, din), lambda i: (i, 0)),
                  pl.BlockSpec((din, out_pad), lambda i: (0, 0)),
                  pl.BlockSpec((1, out_pad), lambda i: (0, 0))],
        out_specs=pl.BlockSpec((tb, out_pad), lambda i: (i, 0)),
        compiler_params=cparams,
    )(scale, shift, z, w_last, b_last)
    return out


# --------------------------------------------------------------------------
# Parameter init (PyTorch-default style) and forward wrapper.
# --------------------------------------------------------------------------
def init_mlp2_params(key, num_layers, input_dim, hidden_dim, output_dim):
    """Linear: W,b ~ U(-1/sqrt(fan_in), 1/sqrt(fan_in)); BN: gamma=1, beta=0.

    Weights stored transposed as (in, out), zero-padded to 128 lanes, bf16.
    gamma/beta are ZERO on padded columns so padded lanes can never leak.
    Hidden-layer biases are kept (for the reference) but not fed to kernels.
    """
    params = []
    in_dim = input_dim
    for _ in range(num_layers - 1):
        key, kw, kb = jax.random.split(key, 3)
        bound = 1.0 / float(in_dim) ** 0.5
        in_p, hid_p = _pad_up(in_dim, LANE), _pad_up(hidden_dim, LANE)
        w = jnp.zeros((in_p, hid_p), jnp.float32).at[:in_dim, :hidden_dim].set(
            jax.random.uniform(kw, (in_dim, hidden_dim), jnp.float32, -bound, bound))
        b = jnp.zeros((1, hid_p), jnp.float32).at[:, :hidden_dim].set(
            jax.random.uniform(kb, (1, hidden_dim), jnp.float32, -bound, bound))
        gamma = jnp.zeros((1, hid_p), jnp.float32).at[:, :hidden_dim].set(1.0)
        beta = jnp.zeros((1, hid_p), jnp.float32)
        params.extend([w.astype(jnp.bfloat16), b, gamma, beta])
        in_dim = hidden_dim
    key, kw, kb = jax.random.split(key, 3)
    bound = 1.0 / float(hidden_dim) ** 0.5
    hid_p, out_p = _pad_up(hidden_dim, LANE), _pad_up(output_dim, LANE)
    w_last = jnp.zeros((hid_p, out_p), jnp.float32).at[:hidden_dim, :output_dim].set(
        jax.random.uniform(kw, (hidden_dim, output_dim), jnp.float32, -bound, bound))
    b_last = jnp.zeros((1, out_p), jnp.float32).at[:, :output_dim].set(
        jax.random.uniform(kb, (1, output_dim), jnp.float32, -bound, bound))
    params.extend([w_last.astype(jnp.bfloat16), b_last])
    return params


@functools.partial(jax.jit,
                   static_argnames=("num_layers", "output_dim",
                                    "force_tiled", "batch_tile"))
def mlp2_forward(x, params, *, num_layers, output_dim,
                 force_tiled=False, batch_tile=256):
    n, f = x.shape
    num_hidden = num_layers - 1
    f_pad = _pad_up(f, LANE)
    out_pad = _pad_up(output_dim, LANE)

    # Kernel params: skip hidden-layer biases (no-op before training-mode BN).
    kparams = []
    idx = 0
    for _ in range(num_hidden):
        w, _b, g, beta = params[idx:idx + 4]
        idx += 4
        kparams.extend([w, g, beta])
    kparams.extend([params[idx], params[idx + 1]])

    budget = _vmem_budget_bytes()

    # All-resident footprint estimate for the monolithic path.
    n_pad16 = _pad_up(n, 16)
    max_hid = max(p.shape[1] for p in kparams)
    param_bytes = sum(int(p.size) * p.dtype.itemsize for p in kparams)
    act_bytes = n_pad16 * max_hid * (4 + 2 + 2)     # z f32 + two live bf16 acts
    footprint = int(1.5 * (n_pad16 * f_pad * 4 + param_bytes
                           + n_pad16 * out_pad * 4 + act_bytes))
    use_tiled = force_tiled or footprint > budget

    if use_tiled:
        tb = _pad_up(min(batch_tile, _pad_up(n, 16)), 16)
        n_pad = _pad_up(n, tb)
    else:
        n_pad = n_pad16

    xp = x
    if f_pad != f or n_pad != n:
        xp = jnp.pad(x, ((0, n_pad - n), (0, f_pad - f)))

    if use_tiled:
        out = _forward_tiled(xp, kparams, num_hidden, n, out_pad, tb, budget)
    else:
        # Advisory cost estimate for the XLA scheduler.
        flops, transc, j, = 0, 0, 0
        for _ in range(num_hidden):
            w = kparams[j]
            flops += 2 * n_pad * w.shape[0] * w.shape[1] + 7 * n_pad * w.shape[1]
            transc += w.shape[1]
            j += 3
        w_l = kparams[j]
        flops += 2 * n_pad * w_l.shape[0] * w_l.shape[1] + n_pad * w_l.shape[1]
        bytes_acc = (xp.size * xp.dtype.itemsize + param_bytes + n_pad * out_pad * 4)

        kernel = _make_fused_kernel(num_hidden, 1.0 / n, n_pad, n)
        vspec = pl.BlockSpec(memory_space=pltpu.MemorySpace.VMEM)
        out = pl.pallas_call(
            kernel,
            out_shape=jax.ShapeDtypeStruct((n_pad, out_pad), jnp.float32),
            in_specs=[vspec] * (1 + len(kparams)),
            out_specs=vspec,
            compiler_params=pltpu.CompilerParams(vmem_limit_bytes=budget),
            cost_estimate=pl.CostEstimate(flops=int(flops),
                                          transcendentals=int(transc),
                                          bytes_accessed=int(bytes_acc)),
        )(xp, *kparams)
    return out[:n, :output_dim]


def mlp2_reference(x, params, num_layers, output_dim):
    """Plain-JAX reference mirroring the PyTorch training-mode forward
    (with hidden biases and canonical two-pass BN), using the same bf16
    matmul operands so it also validates the bias-dropping / folded-affine
    algebra of the kernels."""
    f_pad = params[0].shape[0]
    if x.shape[1] != f_pad:
        x = jnp.pad(x, ((0, 0), (0, f_pad - x.shape[1])))
    h = x.astype(jnp.float32)
    idx = 0
    for _ in range(num_layers - 1):
        w, b, g, beta = params[idx:idx + 4]
        idx += 4
        h = jnp.dot(h.astype(jnp.bfloat16), w, preferred_element_type=jnp.float32) + b
        mean = jnp.mean(h, axis=0, keepdims=True)
        var = jnp.mean((h - mean) ** 2, axis=0, keepdims=True)
        h = (h - mean) / jnp.sqrt(var + BN_EPS)
        h = h * g + beta
        h = jnp.maximum(h, 0.0)
    w, b = params[idx], params[idx + 1]
    out = jnp.dot(h.astype(jnp.bfloat16), w, preferred_element_type=jnp.float32) + b
    return out[:, :output_dim]


if __name__ == "__main__":
    # NOTE: the PyTorch module's drop_out arg is unused (no nn.Dropout added).
    num_layers = 3
    batch, input_dim, hidden_dim, output_dim = 16, 16, 32, 8

    key = jax.random.PRNGKey(0)
    key_x, key_p, key_x2 = jax.random.split(key, 3)
    x = jax.random.normal(key_x, (batch, input_dim), jnp.float32)
    params = init_mlp2_params(key_p, num_layers, input_dim, hidden_dim, output_dim)

    # Path 1: monolithic fused kernel (small shapes, everything VMEM-resident).
    out = mlp2_forward(x, params, num_layers=num_layers, output_dim=output_dim)
    out = jax.block_until_ready(out)
    ref = mlp2_reference(x, params, num_layers, output_dim)
    assert out.shape == (batch, output_dim)
    assert jnp.allclose(out, ref, atol=2e-3, rtol=2e-3), "fused path mismatch"

    # Path 2: batch-tiled parallel path (used for large N / large hidden),
    # exercised at a small size with a ragged batch to cover row masking.
    batch2 = 56
    x2 = jax.random.normal(key_x2, (batch2, input_dim), jnp.float32)
    out2 = mlp2_forward(x2, params, num_layers=num_layers, output_dim=output_dim,
                        force_tiled=True, batch_tile=16)
    out2 = jax.block_until_ready(out2)
    ref2 = mlp2_reference(x2, params, num_layers, output_dim)
    assert out2.shape == (batch2, output_dim)
    assert jnp.allclose(out2, ref2, atol=2e-3, rtol=2e-3), "tiled path mismatch"

    print("KERNEL_OK")
</pallas_src>

<mosaic_0001>
module attributes {stable_mosaic.version = 11 : i64} {
  func.func @kernel(%arg0: memref<16x128xf32, #tpu.memory_space<vmem>>, %arg1: memref<128x128xbf16, #tpu.memory_space<vmem>>, %arg2: memref<1x128xf32, #tpu.memory_space<vmem>>, %arg3: memref<1x128xf32, #tpu.memory_space<vmem>>, %arg4: memref<128x128xbf16, #tpu.memory_space<vmem>>, %arg5: memref<1x128xf32, #tpu.memory_space<vmem>>, %arg6: memref<1x128xf32, #tpu.memory_space<vmem>>, %arg7: memref<128x128xbf16, #tpu.memory_space<vmem>>, %arg8: memref<1x128xf32, #tpu.memory_space<vmem>>, %arg9: memref<16x128xf32, #tpu.memory_space<vmem>>) attributes {dimension_semantics = [], scalar_prefetch = 0 : i64, scratch_operands = 0 : i64, tpu.core_type = #tpu.core_type<tc>} {
    %c0 = arith.constant 0 : index
    %c0_0 = arith.constant 0 : index
    %0 = vector.load %arg0[%c0, %c0_0] : memref<16x128xf32, #tpu.memory_space<vmem>>, vector<16x128xf32>
    %1 = arith.truncf %0 : vector<16x128xf32> to vector<16x128xbf16>
    %c0_1 = arith.constant 0 : index
    %c0_2 = arith.constant 0 : index
    %2 = vector.load %arg1[%c0_1, %c0_2] : memref<128x128xbf16, #tpu.memory_space<vmem>>, vector<128x128xbf16>
    %cst = arith.constant dense<0.000000e+00> : vector<16x128xf32>
    %3 = tpu.matmul %1, %2, %cst {dimension_numbers = #tpu.dot_dimension_numbers<[1], [0], [0], [1], [0, 0, 1, 1], [], []>} : vector<16x128xbf16>, vector<128x128xbf16>, vector<16x128xf32> -> vector<16x128xf32>
    %cst_3 = arith.constant dense<0.000000e+00> : vector<128xf32>
    %4 = vector.multi_reduction <add>, %3, %cst_3 [0] : vector<16x128xf32> to vector<128xf32>
    %5 = vector.shape_cast %4 : vector<128xf32> to vector<1x128xf32>
    %cst_4 = arith.constant 6.250000e-02 : f32
    %6 = vector.broadcast %cst_4 : f32 to vector<1x128xf32>
    %7 = arith.mulf %5, %6 : vector<1x128xf32>
    %8 = arith.mulf %3, %3 : vector<16x128xf32>
    %cst_5 = arith.constant dense<0.000000e+00> : vector<128xf32>
    %9 = vector.multi_reduction <add>, %8, %cst_5 [0] : vector<16x128xf32> to vector<128xf32>
    %10 = vector.shape_cast %9 : vector<128xf32> to vector<1x128xf32>
    %cst_6 = arith.constant 6.250000e-02 : f32
    %11 = vector.broadcast %cst_6 : f32 to vector<1x128xf32>
    %12 = arith.mulf %10, %11 : vector<1x128xf32>
    %13 = arith.mulf %7, %7 : vector<1x128xf32>
    %14 = arith.subf %12, %13 : vector<1x128xf32>
    %cst_7 = arith.constant 0.000000e+00 : f32
    %15 = vector.broadcast %cst_7 : f32 to vector<1x128xf32>
    %16 = arith.maximumf %14, %15 : vector<1x128xf32>
    %c0_8 = arith.constant 0 : index
    %c0_9 = arith.constant 0 : index
    %17 = vector.load %arg2[%c0_8, %c0_9] : memref<1x128xf32, #tpu.memory_space<vmem>>, vector<1x128xf32>
    %cst_10 = arith.constant 9.99999974E-6 : f32
    %18 = vector.broadcast %cst_10 : f32 to vector<1x128xf32>
    %19 = arith.addf %16, %18 : vector<1x128xf32>
    %20 = math.rsqrt %19 : vector<1x128xf32>
    %21 = arith.mulf %17, %20 : vector<1x128xf32>
    %c0_11 = arith.constant 0 : index
    %c0_12 = arith.constant 0 : index
    %22 = vector.load %arg3[%c0_11, %c0_12] : memref<1x128xf32, #tpu.memory_space<vmem>>, vector<1x128xf32>
    %23 = arith.mulf %7, %21 : vector<1x128xf32>
    %24 = arith.subf %22, %23 : vector<1x128xf32>
    %25 = vector.broadcast %21 : vector<1x128xf32> to vector<16x128xf32>
    %26 = arith.mulf %3, %25 : vector<16x128xf32>
    %27 = vector.broadcast %24 : vector<1x128xf32> to vector<16x128xf32>
    %28 = arith.addf %26, %27 : vector<16x128xf32>
    %cst_13 = arith.constant 0.000000e+00 : f32
    %29 = vector.broadcast %cst_13 : f32 to vector<16x128xf32>
    %30 = arith.maximumf %28, %29 : vector<16x128xf32>
    %31 = arith.truncf %30 : vector<16x128xf32> to vector<16x128xbf16>
    %c0_14 = arith.constant 0 : index
    %c0_15 = arith.constant 0 : index
    %32 = vector.load %arg4[%c0_14, %c0_15] : memref<128x128xbf16, #tpu.memory_space<vmem>>, vector<128x128xbf16>
    %cst_16 = arith.constant dense<0.000000e+00> : vector<16x128xf32>
    %33 = tpu.matmul %31, %32, %cst_16 {dimension_numbers = #tpu.dot_dimension_numbers<[1], [0], [0], [1], [0, 0, 1, 1], [], []>} : vector<16x128xbf16>, vector<128x128xbf16>, vector<16x128xf32> -> vector<16x128xf32>
    %cst_17 = arith.constant dense<0.000000e+00> : vector<128xf32>
    %34 = vector.multi_reduction <add>, %33, %cst_17 [0] : vector<16x128xf32> to vector<128xf32>
    %35 = vector.shape_cast %34 : vector<128xf32> to vector<1x128xf32>
    %cst_18 = arith.constant 6.250000e-02 : f32
    %36 = vector.broadcast %cst_18 : f32 to vector<1x128xf32>
    %37 = arith.mulf %35, %36 : vector<1x128xf32>
    %38 = arith.mulf %33, %33 : vector<16x128xf32>
    %cst_19 = arith.constant dense<0.000000e+00> : vector<128xf32>
    %39 = vector.multi_reduction <add>, %38, %cst_19 [0] : vector<16x128xf32> to vector<128xf32>
    %40 = vector.shape_cast %39 : vector<128xf32> to vector<1x128xf32>
    %cst_20 = arith.constant 6.250000e-02 : f32
    %41 = vector.broadcast %cst_20 : f32 to vector<1x128xf32>
    %42 = arith.mulf %40, %41 : vector<1x128xf32>
    %43 = arith.mulf %37, %37 : vector<1x128xf32>
    %44 = arith.subf %42, %43 : vector<1x128xf32>
    %cst_21 = arith.constant 0.000000e+00 : f32
    %45 = vector.broadcast %cst_21 : f32 to vector<1x128xf32>
    %46 = arith.maximumf %44, %45 : vector<1x128xf32>
    %c0_22 = arith.constant 0 : index
    %c0_23 = arith.constant 0 : index
    %47 = vector.load %arg5[%c0_22, %c0_23] : memref<1x128xf32, #tpu.memory_space<vmem>>, vector<1x128xf32>
    %cst_24 = arith.constant 9.99999974E-6 : f32
    %48 = vector.broadcast %cst_24 : f32 to vector<1x128xf32>
    %49 = arith.addf %46, %48 : vector<1x128xf32>
    %50 = math.rsqrt %49 : vector<1x128xf32>
    %51 = arith.mulf %47, %50 : vector<1x128xf32>
    %c0_25 = arith.constant 0 : index
    %c0_26 = arith.constant 0 : index
    %52 = vector.load %arg6[%c0_25, %c0_26] : memref<1x128xf32, #tpu.memory_space<vmem>>, vector<1x128xf32>
    %53 = arith.mulf %37, %51 : vector<1x128xf32>
    %54 = arith.subf %52, %53 : vector<1x128xf32>
    %55 = vector.broadcast %51 : vector<1x128xf32> to vector<16x128xf32>
    %56 = arith.mulf %33, %55 : vector<16x128xf32>
    %57 = vector.broadcast %54 : vector<1x128xf32> to vector<16x128xf32>
    %58 = arith.addf %56, %57 : vector<16x128xf32>
    %cst_27 = arith.constant 0.000000e+00 : f32
    %59 = vector.broadcast %cst_27 : f32 to vector<16x128xf32>
    %60 = arith.maximumf %58, %59 : vector<16x128xf32>
    %61 = arith.truncf %60 : vector<16x128xf32> to vector<16x128xbf16>
    %c0_28 = arith.constant 0 : index
    %c0_29 = arith.constant 0 : index
    %62 = vector.load %arg7[%c0_28, %c0_29] : memref<128x128xbf16, #tpu.memory_space<vmem>>, vector<128x128xbf16>
    %cst_30 = arith.constant dense<0.000000e+00> : vector<16x128xf32>
    %63 = tpu.matmul %61, %62, %cst_30 {dimension_numbers = #tpu.dot_dimension_numbers<[1], [0], [0], [1], [0, 0, 1, 1], [], []>} : vector<16x128xbf16>, vector<128x128xbf16>, vector<16x128xf32> -> vector<16x128xf32>
    %c0_31 = arith.constant 0 : index
    %c0_32 = arith.constant 0 : index
    %64 = vector.load %arg8[%c0_31, %c0_32] : memref<1x128xf32, #tpu.memory_space<vmem>>, vector<1x128xf32>
    %65 = vector.broadcast %64 : vector<1x128xf32> to vector<16x128xf32>
    %66 = arith.addf %63, %65 : vector<16x128xf32>
    %c0_33 = arith.constant 0 : index
    %c0_34 = arith.constant 0 : index
    %67 = vector.load %arg9[%c0_33, %c0_34] : memref<16x128xf32, #tpu.memory_space<vmem>>, vector<16x128xf32>
    tpu.vector_store %arg9[%c0_33, %c0_34], %66 {strides = array<i32>} : memref<16x128xf32, #tpu.memory_space<vmem>>, vector<16x128xf32>,
    return
  }
}

</mosaic_0001>

<llo_original>
// kernel: mlp2_forward.1
$region0: #{mlp2_forward.1}
  #allocation0 [shape = 'u32[]', space=smem, size = 0x4, offset = 0x4, fixed_abs, tag = 'smem constant byte address 0x4 - core index']
  #allocation1 [shape = 'u32[72,128]{1,0:T(1,128)}', space=vmem, size = 0x9000, scoped, tag = 'internal scratch']
  %s0 = inlined_call_operand.vmem [shape: f32[16,128], index: 0, kind: input, shape index: {}]
  %s1 = inlined_call_operand.hbm [shape: bf16[128,128], index: 1, kind: input, shape index: {}]
  %s2 = inlined_call_operand.vmem [shape: f32[1,128], index: 2, kind: input, shape index: {}]
  %s3 = inlined_call_operand.vmem [shape: f32[1,128], index: 3, kind: input, shape index: {}]
  %s4 = inlined_call_operand.hbm [shape: bf16[128,128], index: 4, kind: input, shape index: {}]
  %s5 = inlined_call_operand.vmem [shape: f32[1,128], index: 5, kind: input, shape index: {}]
  %s6 = inlined_call_operand.vmem [shape: f32[1,128], index: 6, kind: input, shape index: {}]
  %s7 = inlined_call_operand.hbm [shape: bf16[128,128], index: 7, kind: input, shape index: {}]
  %s8 = inlined_call_operand.vmem [shape: f32[1,128], index: 8, kind: input, shape index: {}]
  %s9 = inlined_call_operand.vmem [shape: f32[16,128], index: 9, kind: output, shape index: {}]
  %s10 = sld [smem:[#allocation0]]
  $region58: #{mlp2_forward.1} parent=0
    _
  %s12 = ssub.s32 1, %s10
  %s13 = scalar_select 0, %s12, %s10
  $region1: #{mlp2_forward.1} parent=0
    #allocation2 [shape = 'u8[32768]{0}', space=vmem, size = 0x8000, scoped, tag = 'input window, operand 1, single buffered']
    #allocation3 [shape = 's32[1]{0}', space=sflag, size = 0x4, scoped, tag = 'scoped memory for mlp2_forward.1']
    #allocation4 [shape = 'u8[32768]{0}', space=vmem, size = 0x8000, scoped, tag = 'input window, operand 4, single buffered']
    #allocation5 [shape = 's32[1]{0}', space=sflag, size = 0x4, scoped, tag = 'scoped memory for mlp2_forward.1']
    #allocation6 [shape = 'u8[32768]{0}', space=vmem, size = 0x8000, scoped, tag = 'input window, operand 7, single buffered']
    %14 = vsyncpa [#allocation3], 0
    %15 = vsyncpa [#allocation5], 0
    // Predicated region
    $region2: #{mlp2_forward.1} parent=1 // pred_check
      _
    $region3: #{mlp2_forward.1} parent=1 // pred_check_branch
      %17 = sbr.rel (0) target = $region5
    $region4: #{mlp2_forward.1} parent=1 // pred_region
      _
    $region5: #{mlp2_forward.1} parent=1 // pred_fallthru
      _
    // Predicated region
    $region6: #{mlp2_forward.1} parent=1 // pred_check
      _
    $region7: #{mlp2_forward.1} parent=1 // pred_check_branch
      %19 = sbr.rel (0) target = $region9
    $region8: #{mlp2_forward.1} parent=1 // pred_region
      %21 = vsyncadd [#allocation3], 0
      %s22 = sshll.u32 %s1, 4
      %s23 = int_to_ptr.hbm [resolvable:$true] %s22
      %s24 = sshll.u32 [#allocation2], 4
      %s25 = int_to_ptr.vmem [resolvable:$true] %s24
      %30 = dma.hbm_to_vmem [thread:$0]  %s23, 1024, %s25, [#allocation3], 64, 64, 4
    $region9: #{mlp2_forward.1} parent=1 // pred_fallthru
      _
    // Predicated region
    $region10: #{mlp2_forward.1} parent=1 // pred_check
      _
    $region11: #{mlp2_forward.1} parent=1 // pred_check_branch
      %32 = sbr.rel (0) target = $region13
    $region12: #{mlp2_forward.1} parent=1 // pred_region
      _
    $region13: #{mlp2_forward.1} parent=1 // pred_fallthru
      _
    // Predicated region
    $region14: #{mlp2_forward.1} parent=1 // pred_check
      _
    $region15: #{mlp2_forward.1} parent=1 // pred_check_branch
      %34 = sbr.rel (0) target = $region17
    $region16: #{mlp2_forward.1} parent=1 // pred_region
      _
    $region17: #{mlp2_forward.1} parent=1 // pred_fallthru
      _
    // Predicated region
    $region18: #{mlp2_forward.1} parent=1 // pred_check
      _
    $region19: #{mlp2_forward.1} parent=1 // pred_check_branch
      %36 = sbr.rel (0) target = $region21
    $region20: #{mlp2_forward.1} parent=1 // pred_region
      %38 = vsyncadd [#allocation5], 0
      %s39 = sshll.u32 %s4, 4
      %s40 = int_to_ptr.hbm [resolvable:$true] %s39
      %s41 = sshll.u32 [#allocation4], 4
      %s42 = int_to_ptr.vmem [resolvable:$true] %s41
      %47 = dma.hbm_to_vmem [thread:$0]  %s40, 1024, %s42, [#allocation5], 64, 64, 4
    $region21: #{mlp2_forward.1} parent=1 // pred_fallthru
      _
    // Predicated region
    $region22: #{mlp2_forward.1} parent=1 // pred_check
      _
    $region23: #{mlp2_forward.1} parent=1 // pred_check_branch
      %49 = sbr.rel (0) target = $region25
    $region24: #{mlp2_forward.1} parent=1 // pred_region
      _
    $region25: #{mlp2_forward.1} parent=1 // pred_fallthru
      _
    // Predicated region
    $region26: #{mlp2_forward.1} parent=1 // pred_check
      _
    $region27: #{mlp2_forward.1} parent=1 // pred_check_branch
      %51 = sbr.rel (0) target = $region29
    $region28: #{mlp2_forward.1} parent=1 // pred_region
      _
    $region29: #{mlp2_forward.1} parent=1 // pred_fallthru
      _
    // Predicated region
    $region30: #{mlp2_forward.1} parent=1 // pred_check
      _
    $region31: #{mlp2_forward.1} parent=1 // pred_check_branch
      %53 = sbr.rel (0) target = $region33
    $region32: #{mlp2_forward.1} parent=1 // pred_region
      %55 = vsyncadd [#allocation5], 0
      %s56 = sshll.u32 %s7, 4
      %s57 = int_to_ptr.hbm [resolvable:$true] %s56
      %s58 = sshll.u32 [#allocation6], 4
      %s59 = int_to_ptr.vmem [resolvable:$true] %s58
      %64 = dma.hbm_to_vmem [thread:$0]  %s57, 1024, %s59, [#allocation5], 64, 64, 4
    $region33: #{mlp2_forward.1} parent=1 // pred_fallthru
      _
    // Predicated region
    $region34: #{mlp2_forward.1} parent=1 // pred_check
      _
    $region35: #{mlp2_forward.1} parent=1 // pred_check_branch
      %66 = sbr.rel (0) target = $region37
    $region36: #{mlp2_forward.1} parent=1 // pred_region
      _
    $region37: #{mlp2_forward.1} parent=1 // pred_fallthru
      _
    // Predicated region
    $region38: #{mlp2_forward.1} parent=1 // pred_check
      _
    $region39: #{mlp2_forward.1} parent=1 // pred_check_branch
      %68 = sbr.rel (0) target = $region41
    $region40: #{mlp2_forward.1} parent=1 // pred_region
      %70 = dma.done [#allocation3], 1024
    $region41: #{mlp2_forward.1} parent=1 // pred_fallthru
      _
    // Predicated region
    $region42: #{mlp2_forward.1} parent=1 // pred_check
      _
    $region43: #{mlp2_forward.1} parent=1 // pred_check_branch
      %72 = sbr.rel (0) target = $region45
    $region44: #{mlp2_forward.1} parent=1 // pred_region
      %74 = dma.done [#allocation5], 1024
    $region45: #{mlp2_forward.1} parent=1 // pred_fallthru
      _
    // Predicated region
    $region46: #{mlp2_forward.1} parent=1 // pred_check
      _
    $region47: #{mlp2_forward.1} parent=1 // pred_check_branch
      %76 = sbr.rel (0) target = $region49
    $region48: #{mlp2_forward.1} parent=1 // pred_region
      %78 = dma.done [#allocation5], 1024
    $region49: #{mlp2_forward.1} parent=1 // pred_fallthru
      _
    %v79 = vld [vmem:[%s0] sm:$0xff]
    %v80 = vld [vmem:[%s0 + $0x8] sm:$0xff]
    %v81 = vpack.c.bf16 %v80, %v79
    %v82 = vld [vmem:[#allocation2] sm:$0xf]
    %v83 = vld [vmem:[#allocation2 + $0x4] sm:$0xf]
    %v84 = vld [vmem:[#allocation2 + $0x8] sm:$0xf]
    %v85 = vld [vmem:[#allocation2 + $0xc] sm:$0xf]
    %v86 = vld [vmem:[#allocation2 + $0x10] sm:$0xf]
    %v87 = vld [vmem:[#allocation2 + $0x14] sm:$0xf]
    %v88 = vld [vmem:[#allocation2 + $0x18] sm:$0xf]
    %v89 = vld [vmem:[#allocation2 + $0x1c] sm:$0xf]
    %v90 = vld [vmem:[#allocation2 + $0x20] sm:$0xf]
    %v91 = vld [vmem:[#allocation2 + $0x24] sm:$0xf]
    %v92 = vld [vmem:[#allocation2 + $0x28] sm:$0xf]
    %v93 = vld [vmem:[#allocation2 + $0x2c] sm:$0xf]
    %v94 = vld [vmem:[#allocation2 + $0x30] sm:$0xf]
    %v95 = vld [vmem:[#allocation2 + $0x34] sm:$0xf]
    %v96 = vld [vmem:[#allocation2 + $0x38] sm:$0xf]
    %v97 = vld [vmem:[#allocation2 + $0x3c] sm:$0xf]
    %v114 = vunpack.c.l.b16 %v82
    %v115 = vunpack.c.l.b16 %v83
    %v116 = vunpack.c.l.b16 %v84
    %v117 = vunpack.c.l.b16 %v85
    %v118 = vunpack.c.l.b16 %v86
    %v119 = vunpack.c.l.b16 %v87
    %v120 = vunpack.c.l.b16 %v88
    %v121 = vunpack.c.l.b16 %v89
    %v122 = vunpack.c.l.b16 %v90
    %v123 = vunpack.c.l.b16 %v91
    %v124 = vunpack.c.l.b16 %v92
    %v125 = vunpack.c.l.b16 %v93
    %v126 = vunpack.c.l.b16 %v94
    %v127 = vunpack.c.l.b16 %v95
    %v128 = vunpack.c.l.b16 %v96
    %v129 = vunpack.c.l.b16 %v97
    %v130 = vpack.c.b16 %v115, %v114
    %v131 = vpack.c.b16 %v117, %v116
    %v132 = vpack.c.b16 %v119, %v118
    %v133 = vpack.c.b16 %v121, %v120
    %v134 = vpack.c.b16 %v123, %v122
    %v135 = vpack.c.b16 %v125, %v124
    %v136 = vpack.c.b16 %v127, %v126
    %v137 = vpack.c.b16 %v129, %v128
    %146 = vmatpush.bf16.msra.mxu0 %v137
    %147 = vmatpush.bf16.msra.mxu0 %v136
    %148 = vmatpush.bf16.msra.mxu0 %v135
    %149 = vmatpush.bf16.msra.mxu0 %v134
    %150 = vmatpush.bf16.msra.mxu0 %v133
    %151 = vmatpush.bf16.msra.mxu0 %v132
    %152 = vmatpush.bf16.msra.mxu0 %v131
    %153 = vmatpush.bf16.msra.mxu0 %v130
    %154 = vmatmul.bf16.gmra.mxu0 %v81
    %v155 = vpop.f32.mrf.mxu0
    %v156 = vadd.f32 0.0, %v155
    %v157 = vpop.f32.mrf.mxu0
    %v158 = vadd.f32 0.0, %v157
    %159 = vdwg.mxu0
    %v160 = vadd.f32 %v156, %v158
    %v161 = vrot.slane %v160, 4
    %v162 = vadd.f32 %v160, %v161
    %v163 = vrot.slane %v162, 2
    %v164 = vadd.f32 %v162, %v163
    %v165 = vrot.slane %v164, 1
    %v166 = vadd.f32 %v164, %v165
    %v167 = vmul.f32 %v166, 0.0625
    %v168 = vmul.f32 %v156, %v156
    %v169 = vmul.f32 %v158, %v158
    %v170 = vadd.f32 %v168, %v169
    %v171 = vrot.slane %v170, 4
    %v172 = vadd.f32 %v170, %v171
    %v173 = vrot.slane %v172, 2
    %v174 = vadd.f32 %v172, %v173
    %v175 = vrot.slane %v174, 1
    %v176 = vadd.f32 %v174, %v175
    %v177 = vmul.f32 %v176, 0.0625
    %v178 = vmul.f32 %v167, %v167
    %v179 = vsub.f32 %v177, %v178
    %v180 = vmax.f32 %v179, 0.0
    %v181 = vld [vmem:[%s2] sm:$0x1]
    %v182 = vadd.f32 %v180, 1e-05
    %v183 = vrsqrt.pop %v182
    %v184 = vmul.f32 %v183, %v182
    %v185 = vmul.f32 %v184, %v183
    %v186 = vmul.f32 0.5, %v185
    %v187 = vsub.f32 1.5, %v186
    %v188 = vmul.f32 %v183, %v187
    %vm189 = vweird.f32 %v182
    %vm190 = vweird.f32 %v183
    %vm191 = vmor %vm189, %vm190
    %v192 = vsel %vm191, %v183, %v188
    %v193 = vmul.f32 %v181, %v192
    %v194 = vld [vmem:[%s3] sm:$0x1]
    %v195 = vmul.f32 %v167, %v193
    %v196 = vsub.f32 %v194, %v195
    %v198 = vperm.slane %v193, 0
    %v200 = vmul.f32 %v156, %v198
    %v201 = vmul.f32 %v158, %v198
    %v203 = vperm.slane %v196, 0
    %v205 = vadd.f32 %v200, %v203
    %v206 = vadd.f32 %v201, %v203
    %v207 = vmax.f32 %v205, 0.0
    %v208 = vmax.f32 %v206, 0.0
    %v209 = vpack.c.bf16 %v208, %v207
    %v210 = vld [vmem:[#allocation4] sm:$0xf]
    %v211 = vld [vmem:[#allocation4 + $0x4] sm:$0xf]
    %v212 = vld [vmem:[#allocation4 + $0x8] sm:$0xf]
    %v213 = vld [vmem:[#allocation4 + $0xc] sm:$0xf]
    %v214 = vld [vmem:[#allocation4 + $0x10] sm:$0xf]
    %v215 = vld [vmem:[#allocation4 + $0x14] sm:$0xf]
    %v216 = vld [vmem:[#allocation4 + $0x18] sm:$0xf]
    %v217 = vld [vmem:[#allocation4 + $0x1c] sm:$0xf]
    %v218 = vld [vmem:[#allocation4 + $0x20] sm:$0xf]
    %v219 = vld [vmem:[#allocation4 + $0x24] sm:$0xf]
    %v220 = vld [vmem:[#allocation4 + $0x28] sm:$0xf]
    %v221 = vld [vmem:[#allocation4 + $0x2c] sm:$0xf]
    %v222 = vld [vmem:[#allocation4 + $0x30] sm:$0xf]
    %v223 = vld [vmem:[#allocation4 + $0x34] sm:$0xf]
    %v224 = vld [vmem:[#allocation4 + $0x38] sm:$0xf]
    %v225 = vld [vmem:[#allocation4 + $0x3c] sm:$0xf]
    %v242 = vunpack.c.l.b16 %v210
    %v243 = vunpack.c.l.b16 %v211
    %v244 = vunpack.c.l.b16 %v212
    %v245 = vunpack.c.l.b16 %v213
    %v246 = vunpack.c.l.b16 %v214
    %v247 = vunpack.c.l.b16 %v215
    %v248 = vunpack.c.l.b16 %v216
    %v249 = vunpack.c.l.b16 %v217
    %v250 = vunpack.c.l.b16 %v218
    %v251 = vunpack.c.l.b16 %v219
    %v252 = vunpack.c.l.b16 %v220
    %v253 = vunpack.c.l.b16 %v221
    %v254 = vunpack.c.l.b16 %v222
    %v255 = vunpack.c.l.b16 %v223
    %v256 = vunpack.c.l.b16 %v224
    %v257 = vunpack.c.l.b16 %v225
    %v258 = vpack.c.b16 %v243, %v242
    %v259 = vpack.c.b16 %v245, %v244
    %v260 = vpack.c.b16 %v247, %v246
    %v261 = vpack.c.b16 %v249, %v248
    %v262 = vpack.c.b16 %v251, %v250
    %v263 = vpack.c.b16 %v253, %v252
    %v264 = vpack.c.b16 %v255, %v254
    %v265 = vpack.c.b16 %v257, %v256
    %274 = vmatpush.bf16.msra.mxu0 %v265
    %275 = vmatpush.bf16.msra.mxu0 %v264
    %276 = vmatpush.bf16.msra.mxu0 %v263
    %277 = vmatpush.bf16.msra.mxu0 %v262
    %278 = vmatpush.bf16.msra.mxu0 %v261
    %279 = vmatpush.bf16.msra.mxu0 %v260
    %280 = vmatpush.bf16.msra.mxu0 %v259
    %281 = vmatpush.bf16.msra.mxu0 %v258
    %282 = vmatmul.bf16.gmra.mxu0 %v209
    %v283 = vpop.f32.mrf.mxu0
    %v284 = vadd.f32 0.0, %v283
    %v285 = vpop.f32.mrf.mxu0
    %v286 = vadd.f32 0.0, %v285
    %287 = vdwg.mxu0
    %v288 = vadd.f32 %v284, %v286
    %v289 = vrot.slane %v288, 4
    %v290 = vadd.f32 %v288, %v289
    %v291 = vrot.slane %v290, 2
    %v292 = vadd.f32 %v290, %v291
    %v293 = vrot.slane %v292, 1
    %v294 = vadd.f32 %v292, %v293
    %v295 = vmul.f32 %v294, 0.0625
    %v296 = vmul.f32 %v284, %v284
    %v297 = vmul.f32 %v286, %v286
    %v298 = vadd.f32 %v296, %v297
    %v299 = vrot.slane %v298, 4
    %v300 = vadd.f32 %v298, %v299
    %v301 = vrot.slane %v300, 2
    %v302 = vadd.f32 %v300, %v301
    %v303 = vrot.slane %v302, 1
    %v304 = vadd.f32 %v302, %v303
    %v305 = vmul.f32 %v304, 0.0625
    %v306 = vmul.f32 %v295, %v295
    %v307 = vsub.f32 %v305, %v306
    %v308 = vmax.f32 %v307, 0.0
    %v309 = vld [vmem:[%s5] sm:$0x1]
    %v310 = vadd.f32 %v308, 1e-05
    %v311 = vrsqrt.pop %v310
    %v312 = vmul.f32 %v311, %v310
    %v313 = vmul.f32 %v312, %v311
    %v314 = vmul.f32 0.5, %v313
    %v315 = vsub.f32 1.5, %v314
    %v316 = vmul.f32 %v311, %v315
    %vm317 = vweird.f32 %v310
    %vm318 = vweird.f32 %v311
    %vm319 = vmor %vm317, %vm318
    %v320 = vsel %vm319, %v311, %v316
    %v321 = vmul.f32 %v309, %v320
    %v322 = vld [vmem:[%s6] sm:$0x1]
    %v323 = vmul.f32 %v295, %v321
    %v324 = vsub.f32 %v322, %v323
    %v326 = vperm.slane %v321, 0
    %v328 = vmul.f32 %v284, %v326
    %v329 = vmul.f32 %v286, %v326
    %v331 = vperm.slane %v324, 0
    %v333 = vadd.f32 %v328, %v331
    %v334 = vadd.f32 %v329, %v331
    %v335 = vmax.f32 %v333, 0.0
    %v336 = vmax.f32 %v334, 0.0
    %v337 = vpack.c.bf16 %v336, %v335
    %v338 = vld [vmem:[#allocation6] sm:$0xf]
    %v339 = vld [vmem:[#allocation6 + $0x4] sm:$0xf]
    %v340 = vld [vmem:[#allocation6 + $0x8] sm:$0xf]
    %v341 = vld [vmem:[#allocation6 + $0xc] sm:$0xf]
    %v342 = vld [vmem:[#allocation6 + $0x10] sm:$0xf]
    %v343 = vld [vmem:[#allocation6 + $0x14] sm:$0xf]
    %v344 = vld [vmem:[#allocation6 + $0x18] sm:$0xf]
    %v345 = vld [vmem:[#allocation6 + $0x1c] sm:$0xf]
    %v346 = vld [vmem:[#allocation6 + $0x20] sm:$0xf]
    %v347 = vld [vmem:[#allocation6 + $0x24] sm:$0xf]
    %v348 = vld [vmem:[#allocation6 + $0x28] sm:$0xf]
    %v349 = vld [vmem:[#allocation6 + $0x2c] sm:$0xf]
    %v350 = vld [vmem:[#allocation6 + $0x30] sm:$0xf]
    %v351 = vld [vmem:[#allocation6 + $0x34] sm:$0xf]
    %v352 = vld [vmem:[#allocation6 + $0x38] sm:$0xf]
    %v353 = vld [vmem:[#allocation6 + $0x3c] sm:$0xf]
    %v354 = vld [vmem:[%s8] sm:$0x1]
    %v356 = vperm.slane %v354, 0
    %v374 = vunpack.c.l.b16 %v338
    %v375 = vunpack.c.l.b16 %v339
    %v376 = vunpack.c.l.b16 %v340
    %v377 = vunpack.c.l.b16 %v341
    %v378 = vunpack.c.l.b16 %v342
    %v379 = vunpack.c.l.b16 %v343
    %v380 = vunpack.c.l.b16 %v344
    %v381 = vunpack.c.l.b16 %v345
    %v382 = vunpack.c.l.b16 %v346
    %v383 = vunpack.c.l.b16 %v347
    %v384 = vunpack.c.l.b16 %v348
    %v385 = vunpack.c.l.b16 %v349
    %v386 = vunpack.c.l.b16 %v350
    %v387 = vunpack.c.l.b16 %v351
    %v388 = vunpack.c.l.b16 %v352
    %v389 = vunpack.c.l.b16 %v353
    %v390 = vpack.c.b16 %v375, %v374
    %v391 = vpack.c.b16 %v377, %v376
    %v392 = vpack.c.b16 %v379, %v378
    %v393 = vpack.c.b16 %v381, %v380
    %v394 = vpack.c.b16 %v383, %v382
    %v395 = vpack.c.b16 %v385, %v384
    %v396 = vpack.c.b16 %v387, %v386
    %v397 = vpack.c.b16 %v389, %v388
    %406 = vmatpush.bf16.msra.mxu0 %v397
    %407 = vmatpush.bf16.msra.mxu0 %v396
    %408 = vmatpush.bf16.msra.mxu0 %v395
    %409 = vmatpush.bf16.msra.mxu0 %v394
    %410 = vmatpush.bf16.msra.mxu0 %v393
    %411 = vmatpush.bf16.msra.mxu0 %v392
    %412 = vmatpush.bf16.msra.mxu0 %v391
    %413 = vmatpush.bf16.msra.mxu0 %v390
    %414 = vmatmul.bf16.gmra.mxu0 %v337
    %v415 = vpop.f32.mrf.mxu0
    %v416 = vadd.f32 %v356, %v415
    %v417 = vpop.f32.mrf.mxu0
    %v418 = vadd.f32 %v356, %v417
    %419 = vdwg.mxu0
    %420 = vst [vmem:[%s9] sm:$0xff] %v416
    %421 = vst [vmem:[%s9 + $0x8] sm:$0xff] %v418
    // Predicated region
    $region50: #{mlp2_forward.1} parent=1 // pred_check
      _
    $region51: #{mlp2_forward.1} parent=1 // pred_check_branch
      %423 = sbr.rel (0) target = $region53
    $region52: #{mlp2_forward.1} parent=1 // pred_region
      _
    $region53: #{mlp2_forward.1} parent=1 // pred_fallthru
      _
    // Predicated region
    $region54: #{mlp2_forward.1} parent=1 // pred_check
      _
    $region55: #{mlp2_forward.1} parent=1 // pred_check_branch
      %425 = sbr.rel (0) target = $region57
    $region56: #{mlp2_forward.1} parent=1 // pred_region
      _
    $region57: #{mlp2_forward.1} parent=1 // pred_fallthru
      _
    %426 = vsyncpa [#allocation3], 1
    %427 = vsyncpa [#allocation5], 1

</llo_original>
